<compile_context>
chip_gen: v6e
topology: v6e:2x2x1
jax: 0.10.0
libtpu: 0.0.40
codegen_flags: <defaults>
</compile_context>

<pallas_src>
import math

import jax
import jax.numpy as jnp
from jax.experimental import pallas as pl
from jax.experimental.pallas import tpu as pltpu

LN_2PI = math.log(2.0 * math.pi)


# ---------------------------------------------------------------------------
# Kernel: one (tile_c, tile_n) output block per grid point.
# ---------------------------------------------------------------------------
def normal_prob_kernel(mean_ref, std_ref, x_ref, o_ref):
    mean = mean_ref[...]          # (Ct, 1) f32
    std = std_ref[...]            # (Ct, 1) f32
    x = x_ref[...]                # (1, Nt) f32

    # Per-channel scalars, computed once per (Ct,1) block.
    inv_var_half = 0.5 / (std * std)               # 0.5 / std^2
    base = -jnp.log(std) - 0.5 * LN_2PI            # -log(std) - ln(2*pi)/2

    # Per element: sub, mul, mul, sub  (broadcast (Ct,1) x (1,Nt) -> (Ct,Nt)),
    # then one EUP exp.  Numerically equivalent to base - ((x-mean)/std)^2/2.
    d = x - mean
    logp = base - inv_var_half * (d * d)
    o_ref[...] = jnp.exp(logp).astype(o_ref.dtype)


# ---------------------------------------------------------------------------
# Tile selection: big (multi-MiB) lane-dense output blocks, VMEM-safe on
# v5e/v6e/v7x, and >= 2 parallel grid steps when the problem allows.
# ---------------------------------------------------------------------------
def _round_up(v, m):
    return ((v + m - 1) // m) * m


def _choose_tiles(C, N, out_itemsize):
    # Minimum sublane pack: 8 rows for 4-byte outputs, 16 for 2-byte (bf16).
    sub = 8 if out_itemsize >= 4 else 16
    # Cover as much of C as possible in one block (avoids re-streaming x and
    # recomputing per-channel scalars), capped at 256 rows.
    tile_c = min(256, _round_up(C, sub))

    n_full = _round_up(N, 128)
    # Target ~4 MiB f32 output blocks: 8 MiB double-buffered fits v5e's 16 MiB
    # scoped-VMEM default and leaves ample headroom on v7x (32 MiB scoped).
    target_elems = (4 << 20) // 4
    tile_n = max(128, (target_elems // tile_c) // 128 * 128)
    tile_n = min(tile_n, n_full, 1 << 15)

    # Keep at least 2 grid steps along the (parallel) N axis so both of v7x's
    # TensorCores get work on small problems.
    if C <= tile_c and tile_n >= n_full and N > 256:
        tile_n = max(128, _round_up(pl.cdiv(N, 2), 128))
    return tile_c, tile_n


# ---------------------------------------------------------------------------
# Wrapper: pads only the tiny 1-D inputs; output is emitted at its exact
# (C, N) shape (Pallas masks boundary writes for overhanging blocks).
# ---------------------------------------------------------------------------
def normal_prob(mean, std, x, *, tile_c=None, tile_n=None):
    C = mean.shape[0]
    N = x.shape[0]
    out_dtype = x.dtype

    if tile_c is None or tile_n is None:
        tc, tn = _choose_tiles(C, N, jnp.dtype(out_dtype).itemsize)
        tile_c = tile_c if tile_c is not None else tc
        tile_n = tile_n if tile_n is not None else tn

    Cp = pl.cdiv(C, tile_c) * tile_c
    Np = pl.cdiv(N, tile_n) * tile_n

    # Pad the (cheap, 1-D) inputs so input blocks tile them exactly; std pads
    # with 1.0 so log / reciprocal stay well-defined in the masked rows.
    mean_p = jnp.pad(mean.astype(jnp.float32), (0, Cp - C)).reshape(Cp, 1)
    std_p = jnp.pad(std.astype(jnp.float32), (0, Cp - C),
                    constant_values=1.0).reshape(Cp, 1)
    x_p = jnp.pad(x.astype(jnp.float32), (0, Np - N)).reshape(1, Np)

    grid = (Cp // tile_c, Np // tile_n)

    return pl.pallas_call(
        normal_prob_kernel,
        out_shape=jax.ShapeDtypeStruct((C, N), out_dtype),
        grid_spec=pl.GridSpec(
            grid=grid,
            in_specs=[
                pl.BlockSpec((tile_c, 1), lambda i, j: (i, 0)),   # mean
                pl.BlockSpec((tile_c, 1), lambda i, j: (i, 0)),   # std
                pl.BlockSpec((1, tile_n), lambda i, j: (0, j)),   # x (shared over C)
            ],
            out_specs=pl.BlockSpec((tile_c, tile_n), lambda i, j: (i, j)),
        ),
        compiler_params=pltpu.CompilerParams(
            dimension_semantics=("parallel", "parallel")),
    )(mean_p, std_p, x_p)


# ---------------------------------------------------------------------------
# Pure-JAX reference (mirrors the PyTorch forward exactly) for verification.
# ---------------------------------------------------------------------------
def normal_prob_ref(mean, std, x):
    ln2p = jnp.asarray(LN_2PI, dtype=jnp.float32)
    logp = (-jnp.log(std)[:, None]
            - ln2p / 2.0
            - ((x[None, :] - mean[:, None]) / std[:, None]) ** 2 / 2.0)
    return jnp.exp(logp).astype(x.dtype)


if __name__ == "__main__":
    key = jax.random.PRNGKey(0)
    k_mean, k_std, k_x = jax.random.split(key, 3)

    run = jax.jit(normal_prob)

    # Case 1: 8 mixture components evaluated at 8192 points (tile-aligned,
    # 2 parallel grid steps along N).
    C, N = 8, 8192
    mean = jax.random.normal(k_mean, (C,), dtype=jnp.float32)
    std = jax.nn.softplus(jax.random.normal(k_std, (C,), dtype=jnp.float32)) + 0.1
    x = 2.0 * jax.random.normal(k_x, (N,), dtype=jnp.float32)

    out = jax.block_until_ready(run(mean, std, x))
    ref = normal_prob_ref(mean, std, x)
    assert out.shape == (C, N)
    assert bool(jnp.allclose(out, ref, rtol=3e-5, atol=1e-6)), (
        float(jnp.max(jnp.abs(out - ref))))

    # Case 2: ragged shapes (C, N not tile multiples) -> exercises masked
    # boundary writes of the un-padded (C, N) output.
    C2, N2 = 5, 1000
    out2 = jax.block_until_ready(run(mean[:C2], std[:C2], x[:N2]))
    ref2 = normal_prob_ref(mean[:C2], std[:C2], x[:N2])
    assert out2.shape == (C2, N2)
    assert bool(jnp.allclose(out2, ref2, rtol=3e-5, atol=1e-6)), (
        float(jnp.max(jnp.abs(out2 - ref2))))

    print("KERNEL_OK")
</pallas_src>

<mosaic_0001>
module attributes {stable_mosaic.version = 11 : i64} {
  func.func @normal_prob_kernel(%arg0: i32, %arg1: i32, %arg2: memref<8x1xf32, #tpu.memory_space<vmem>>, %arg3: memref<8x1xf32, #tpu.memory_space<vmem>>, %arg4: memref<1x4096xf32, #tpu.memory_space<vmem>>, %arg5: memref<8x4096xf32, #tpu.memory_space<vmem>>) attributes {dimension_semantics = [#tpu.dimension_semantics<parallel>, #tpu.dimension_semantics<parallel>], iteration_bounds = array<i64: 1, 2>, scalar_prefetch = 0 : i64, scratch_operands = 0 : i64, tpu.core_type = #tpu.core_type<tc>, window_params = [{transform_indices = @transform_0, window_bounds = array<i64: 8, 1>}, {transform_indices = @transform_1, window_bounds = array<i64: 8, 1>}, {transform_indices = @transform_2, window_bounds = array<i64: 1, 4096>}, {transform_indices = @transform_3, window_bounds = array<i64: 8, 4096>}]} {
    %c0 = arith.constant 0 : index
    %c0_0 = arith.constant 0 : index
    %0 = vector.load %arg2[%c0, %c0_0] : memref<8x1xf32, #tpu.memory_space<vmem>>, vector<8x1xf32>
    %c0_1 = arith.constant 0 : index
    %c0_2 = arith.constant 0 : index
    %1 = vector.load %arg3[%c0_1, %c0_2] : memref<8x1xf32, #tpu.memory_space<vmem>>, vector<8x1xf32>
    %c0_3 = arith.constant 0 : index
    %c0_4 = arith.constant 0 : index
    %2 = vector.load %arg4[%c0_3, %c0_4] : memref<1x4096xf32, #tpu.memory_space<vmem>>, vector<1x4096xf32>
    %3 = arith.mulf %1, %1 : vector<8x1xf32>
    %cst = arith.constant 5.000000e-01 : f32
    %4 = vector.broadcast %cst : f32 to vector<8x1xf32>
    %5 = arith.divf %4, %3 : vector<8x1xf32>
    %6 = math.log %1 : vector<8x1xf32>
    %cst_5 = arith.constant 0.000000e+00 : f32
    %7 = vector.broadcast %cst_5 : f32 to vector<8x1xf32>
    %8 = arith.subf %7, %6 : vector<8x1xf32>
    %cst_6 = arith.constant 0.918938517 : f32
    %9 = vector.broadcast %cst_6 : f32 to vector<8x1xf32>
    %10 = arith.subf %8, %9 : vector<8x1xf32>
    %11 = vector.broadcast %2 : vector<1x4096xf32> to vector<8x4096xf32>
    %12 = vector.broadcast %0 : vector<8x1xf32> to vector<8x4096xf32>
    %13 = arith.subf %11, %12 : vector<8x4096xf32>
    %14 = arith.mulf %13, %13 : vector<8x4096xf32>
    %15 = vector.broadcast %5 : vector<8x1xf32> to vector<8x4096xf32>
    %16 = arith.mulf %15, %14 : vector<8x4096xf32>
    %17 = vector.broadcast %10 : vector<8x1xf32> to vector<8x4096xf32>
    %18 = arith.subf %17, %16 : vector<8x4096xf32>
    %19 = math.exp %18 : vector<8x4096xf32>
    %c0_7 = arith.constant 0 : index
    %c0_8 = arith.constant 0 : index
    %20 = vector.load %arg5[%c0_7, %c0_8] : memref<8x4096xf32, #tpu.memory_space<vmem>>, vector<8x4096xf32>
    tpu.vector_store %arg5[%c0_7, %c0_8], %19 {strides = array<i32>} : memref<8x4096xf32, #tpu.memory_space<vmem>>, vector<8x4096xf32>,
    return
  }
  func.func @transform_0(%arg0: i32, %arg1: i32) -> (i32, i32) {
    %c0_i32 = arith.constant 0 : i32
    %c0_i32_0 = arith.constant 0 : i32
    return %arg0, %c0_i32 : i32, i32
  }
  func.func @transform_1(%arg0: i32, %arg1: i32) -> (i32, i32) {
    %c0_i32 = arith.constant 0 : i32
    %c0_i32_0 = arith.constant 0 : i32
    return %arg0, %c0_i32 : i32, i32
  }
  func.func @transform_2(%arg0: i32, %arg1: i32) -> (i32, i32) {
    %c0_i32 = arith.constant 0 : i32
    %c0_i32_0 = arith.constant 0 : i32
    return %c0_i32, %arg1 : i32, i32
  }
  func.func @transform_3(%arg0: i32, %arg1: i32) -> (i32, i32) {
    %c0_i32 = arith.constant 0 : i32
    return %arg0, %arg1 : i32, i32
  }
}

</mosaic_0001>

<llo_original>
// kernel: normal_prob.1
$region0: #{normal_prob.1}
  #allocation0 [shape = 'u32[]', space=smem, size = 0x4, offset = 0x4, fixed_abs, tag = 'smem constant byte address 0x4 - core index']
  #allocation1 [shape = 'u32[144,128]{1,0:T(1,128)}', space=vmem, size = 0x12000, scoped, tag = 'internal scratch']
  %s0 = inlined_call_operand.vmem [shape: f32[8,1], index: 0, kind: input, shape index: {}]
  %s1 = inlined_call_operand.vmem [shape: f32[8,1], index: 1, kind: input, shape index: {}]
  %s2 = inlined_call_operand.hbm [shape: f32[1,8192], index: 2, kind: input, shape index: {}]
  %s3 = inlined_call_operand.hbm [shape: f32[8,8192], index: 3, kind: output, shape index: {}]
  %s4 = sld [smem:[#allocation0]]
  $region49: #{normal_prob.1} parent=0
    _
  %s6 = ssub.s32 1, %s4
  %s7 = scalar_select 0, %s6, %s4
  $region1: #{normal_prob.1} parent=0
    #allocation2 [shape = 'u8[32768]{0}', space=vmem, size = 0x8000, scoped, tag = 'input window, operand 2']
    #allocation3 [shape = 's32[2]{0}', space=sflag, size = 0x8, scoped, tag = 'scoped memory for normal_prob.1']
    #allocation4 [shape = 's32[2]{0}', space=sflag, size = 0x8, scoped, tag = 'scoped memory for normal_prob.1']
    #allocation5 [shape = 'u8[262144]{0}', space=vmem, size = 0x40000, scoped, tag = 'output window, operand 0']
    %8 = vsyncpa [#allocation3], 0
    %s9 = scalar_lea.sflag [#allocation3], 1
    %10 = vsyncpa %s9, 0
    %11 = vsyncpa [#allocation4], 0
    %s12 = scalar_lea.sflag [#allocation4], 1
    %13 = vsyncpa %s12, 0
    loop: start=0, step=1, limit=4
    $region2: #{normal_prob.1} parent=1 // loop_pre_header
      _
    $region3: #{normal_prob.1} parent=1 // loop_header
      %s15 = sphi 0, %s19
      %p16 = scmp.ge.s32.totalorder %s15, 4
      %s22 = sphi 0, %s34
      %s23 = sphi 0, %s30
      %s24 = sphi 0, %s22
      %s25 = sphi 0, %s23
      %s26 = sphi 0, %s24
      %s27 = sphi 0, %s25
      %s37 = sphi 0, %s39
      %s40 = sphi 0, %s37
      %s41 = sphi 0, %s40
      %s57 = sphi 0, %s41
      %s63 = sphi 0, %s65
      %s66 = sphi 0, %s63
      %s67 = sphi 0, %s66
      %s83 = sphi 0, %s67
      %s89 = sphi 0, %s91
      %s92 = sphi 0, %s89
      %s93 = sphi 0, %s92
      %s109 = sphi 0, %s93
      %s117 = sphi 0, %s119
      %s120 = sphi 0, %s117
      %s121 = sphi 0, %s120
      %s137 = sphi 0, %s121
    $region4: #{normal_prob.1} parent=1 // loop_header_branch
      %18 = sbr.rel (%p16) target = $region8
    $region5: #{normal_prob.1} parent=1 // loop_body
      %s20 = ssub.s32 %s15, 1
      %s21 = ssub.s32 %s15, 2
      %s28 = sadd.s32 1, %s23
      %p29 = scmp.ge.s32.totalorder %s28, 2
      %s30 = scalar_select %p29, 0, %s28
      %s31 = sadd.s32 1, %s22
      %s32 = scalar_select %p29, %s31, %s22
      %p33 = scmp.ge.s32.totalorder %s32, 1
      %s34 = scalar_select %p33, 0, %s32
      %s35 = ssub.s32 %s22, %s34
      %p36 = scmp.eq.s32.totalorder %s35, 0
      %s38 = sadd.s32 %s37, 1
      %s39 = scalar_select %p36, %s37, %s38
      %p42 = pneg %p36
      %p43 = scmp.eq.s32.totalorder %s15, 1
      %p44 = por %p42, %p43
      %p45 = scmp.ne.s32.totalorder %s37, %s40
      %p46 = scmp.eq.s32.totalorder %s15, 0
      %p47 = por %p45, %p46
      %p48 = scmp.ne.s32.totalorder %s37, %s40
      %p49 = scmp.eq.s32.totalorder %s20, 1
      %p50 = por %p48, %p49
      %p51 = scmp.ne.s32.totalorder %s40, %s41
      %p52 = scmp.eq.s32.totalorder %s20, 0
      %p53 = por %p51, %p52
      %p54 = scmp.ne.s32.totalorder %s40, %s41
      %p55 = scmp.eq.s32.totalorder %s21, 1
      %p56 = por %p54, %p55
      %p58 = scmp.ne.s32.totalorder %s41, %s57
      %p59 = scmp.eq.s32.totalorder %s21, 0
      %p60 = por %p58, %p59
      %s61 = ssub.s32 %s22, %s34
      %p62 = scmp.eq.s32.totalorder %s61, 0
      %s64 = sadd.s32 %s63, 1
      %s65 = scalar_select %p62, %s63, %s64
      %p68 = pneg %p62
      %p69 = scmp.eq.s32.totalorder %s15, 1
      %p70 = por %p68, %p69
      %p71 = scmp.ne.s32.totalorder %s63, %s66
      %p72 = scmp.eq.s32.totalorder %s15, 0
      %p73 = por %p71, %p72
      %p74 = scmp.ne.s32.totalorder %s63, %s66
      %p75 = scmp.eq.s32.totalorder %s20, 1
      %p76 = por %p74, %p75
      %p77 = scmp.ne.s32.totalorder %s66, %s67
      %p78 = scmp.eq.s32.totalorder %s20, 0
      %p79 = por %p77, %p78
      %p80 = scmp.ne.s32.totalorder %s66, %s67
      %p81 = scmp.eq.s32.totalorder %s21, 1
      %p82 = por %p80, %p81
      %p84 = scmp.ne.s32.totalorder %s67, %s83
      %p85 = scmp.eq.s32.totalorder %s21, 0
      %p86 = por %p84, %p85
      %s87 = ssub.s32 %s23, %s30
      %p88 = scmp.eq.s32.totalorder %s87, 0
      %s90 = sadd.s32 %s89, 1
      %s91 = scalar_select %p88, %s89, %s90
      %p94 = pneg %p88
      %p95 = scmp.eq.s32.totalorder %s15, 1
      %p96 = por %p94, %p95
      %p97 = scmp.ne.s32.totalorder %s89, %s92
      %p98 = scmp.eq.s32.totalorder %s15, 0
      %p99 = por %p97, %p98
      %p100 = scmp.ne.s32.totalorder %s89, %s92
      %p101 = scmp.eq.s32.totalorder %s20, 1
      %p102 = por %p100, %p101
      %p103 = scmp.ne.s32.totalorder %s92, %s93
      %p104 = scmp.eq.s32.totalorder %s20, 0
      %p105 = por %p103, %p104
      %p106 = scmp.ne.s32.totalorder %s92, %s93
      %p107 = scmp.eq.s32.totalorder %s21, 1
      %p108 = por %p106, %p107
      %p110 = scmp.ne.s32.totalorder %s93, %s109
      %p111 = scmp.eq.s32.totalorder %s21, 0
      %p112 = por %p110, %p111
      %s113 = ssub.s32 %s22, %s34
      %s114 = ssub.s32 %s23, %s30
      %s115 = sor.u32 %s113, %s114
      %p116 = scmp.eq.s32.totalorder %s115, 0
      %s118 = sadd.s32 %s117, 1
      %s119 = scalar_select %p116, %s117, %s118
      %p122 = pneg %p116
      %p123 = scmp.eq.s32.totalorder %s15, 1
      %p124 = por %p122, %p123
      %p125 = scmp.ne.s32.totalorder %s117, %s120
      %p126 = scmp.eq.s32.totalorder %s15, 0
      %p127 = por %p125, %p126
      %p128 = scmp.ne.s32.totalorder %s117, %s120
      %p129 = scmp.eq.s32.totalorder %s20, 1
      %p130 = por %p128, %p129
      %p131 = scmp.ne.s32.totalorder %s120, %s121
      %p132 = scmp.eq.s32.totalorder %s20, 0
      %p133 = por %p131, %p132
      %p134 = scmp.ne.s32.totalorder %s120, %s121
      %p135 = scmp.eq.s32.totalorder %s21, 1
      %p136 = por %p134, %p135
      %p138 = scmp.ne.s32.totalorder %s121, %s137
      %p139 = scmp.eq.s32.totalorder %s21, 0
      %p140 = por %p138, %p139
      %p141 = scmp.le.s32.totalorder 1, %s15
      %p142 = scmp.lt.s32.totalorder %s15, 3
      %p143 = pnand %p141, %p142
      %p144 = pneg %p143
      // Predicated region
      $region9: #{normal_prob.1} parent=5 // pred_check
        _
      $region10: #{normal_prob.1} parent=5 // pred_check_branch
        %146 = sbr.rel (%p143) target = $region12
      $region11: #{normal_prob.1} parent=5 // pred_region
        %s147 = ssub.s32 %s15, 1
        // Predicated region
        $region13: #{normal_prob.1} parent=11 // pred_check
          %p148 = pneg %p53
        $region14: #{normal_prob.1} parent=11 // pred_check_branch
          %150 = sbr.rel (%p148) target = $region16
        $region15: #{normal_prob.1} parent=11 // pred_region
          %p151 = scmp.lt.s32.totalorder %s24, 0
          %s152 = scalar_select %p151, %s24, 0
          %s153 = smul.addr %s152, 8
          %s154 = scalar_lea.vmem %s0, %s153
        $region16: #{normal_prob.1} parent=11 // pred_fallthru
          _
        // Predicated region
        $region17: #{normal_prob.1} parent=11 // pred_check
          %p155 = pneg %p79
        $region18: #{normal_prob.1} parent=11 // pred_check_branch
          %157 = sbr.rel (%p155) target = $region20
        $region19: #{normal_prob.1} parent=11 // pred_region
          %p158 = scmp.lt.s32.totalorder %s24, 0
          %s159 = scalar_select %p158, %s24, 0
          %s160 = smul.addr %s159, 8
          %s161 = scalar_lea.vmem %s1, %s160
        $region20: #{normal_prob.1} parent=11 // pred_fallthru
          _
      $region12: #{normal_prob.1} parent=5 // pred_fallthru
        _
      %p162 = scmp.lt.s32.totalorder %s15, 2
      // Predicated region
      $region21: #{normal_prob.1} parent=5 // pred_check
        %p163 = pneg %p162
      $region22: #{normal_prob.1} parent=5 // pred_check_branch
        %165 = sbr.rel (%p163) target = $region24
      $region23: #{normal_prob.1} parent=5 // pred_region
        // Predicated region
        $region25: #{normal_prob.1} parent=23 // pred_check
          %p166 = pneg %p99
        $region26: #{normal_prob.1} parent=23 // pred_check_branch
          %168 = sbr.rel (%p166) target = $region28
        $region27: #{normal_prob.1} parent=23 // pred_region
          %s169 = sand.u32 %s89, 1
          %s170 = scalar_lea.sflag [#allocation3], %s169
          %s171 = sand.u32 %s89, 1
          %s172 = smul.addr %s171, 32
          %s173 = scalar_lea.vmem [#allocation2], %s172
          %s174 = smul.u32 32, %s23
          %s176 = ssub.s32 512, 512
          %177 = vsyncadd %s170, %s176
          %s178 = smul.addr %s174, 16
          %s179 = scalar_lea.hbm %s2, %s178
          %s181 = sshll.u32 %s173, 4
          %s182 = int_to_ptr.vmem [resolvable:$true] %s181
          %184 = dma.hbm_to_vmem [thread:$0]  %s179, 512, %s182, %s170
        $region28: #{normal_prob.1} parent=23 // pred_fallthru
          _
      $region24: #{normal_prob.1} parent=5 // pred_fallthru
        _
      %p185 = scmp.le.s32.totalorder 1, %s15
      %p186 = scmp.lt.s32.totalorder %s15, 3
      %p187 = pnand %p185, %p186
      %p188 = pneg %p187
      // Predicated region
      $region29: #{normal_prob.1} parent=5 // pred_check
        _
      $region30: #{normal_prob.1} parent=5 // pred_check_branch
        %190 = sbr.rel (%p187) target = $region32
      $region31: #{normal_prob.1} parent=5 // pred_region
        %s191 = ssub.s32 %s15, 1
        %s192 = sand.u32 %s92, 1
        %s193 = scalar_lea.sflag [#allocation3], %s192
        %s194 = sand.u32 %s92, 1
        %s195 = smul.addr %s194, 32
        %s196 = scalar_lea.vmem [#allocation2], %s195
        // Predicated region
        $region33: #{normal_prob.1} parent=31 // pred_check
          %p197 = pneg %p105
        $region34: #{normal_prob.1} parent=31 // pred_check_branch
          %199 = sbr.rel (%p197) target = $region36
        $region35: #{normal_prob.1} parent=31 // pred_region
          %200 = dma.done %s193, 512
        $region36: #{normal_prob.1} parent=31 // pred_fallthru
          _
        %p201 = scmp.lt.s32.totalorder %s24, 0
        %s202 = scalar_select %p201, %s24, 0
        %s203 = smul.addr %s202, 8
        %s204 = scalar_lea.vmem %s0, %s203
        %p205 = pneg %p53
        %p206 = pneg %p50
        %p207 = scmp.lt.s32.totalorder %s24, 0
        %s208 = scalar_select %p207, %s24, 0
        %s209 = smul.addr %s208, 8
        %s210 = scalar_lea.vmem %s1, %s209
        %p211 = pneg %p79
        %p212 = pneg %p76
        %s213 = sand.u32 %s92, 1
        %s214 = scalar_lea.sflag [#allocation3], %s213
        %s215 = sand.u32 %s92, 1
        %s216 = smul.addr %s215, 32
        %s217 = scalar_lea.vmem [#allocation2], %s216
        %p218 = pneg %p105
        %p219 = pneg %p102
        %p220 = pneg %p133
        %p221 = pneg %p130
        %s222 = sand.u32 %s120, 1
        %s223 = scalar_lea.sflag [#allocation4], %s222
        %s224 = sand.u32 %s120, 1
        %s225 = smul.addr %s224, 256
        %s226 = scalar_lea.vmem [#allocation5], %s225
        %p227 = scmp.lt.s32.totalorder %s24, 0
        %s228 = scalar_select %p227, %s24, 0
        %s229 = smul.addr %s228, 8
        %s230 = scalar_lea.vmem %s0, %s229
        %p231 = scmp.lt.s32.totalorder %s24, 0
        %s232 = scalar_select %p231, %s24, 0
        %s233 = smul.addr %s232, 8
        %s234 = scalar_lea.vmem %s1, %s233
        %s235 = smul.u32 32, %s25
        %s236 = smul.u32 32, %s25
        %v237 = vld [vmem:[%s230] sm:$0xff]
        %v238 = vld [vmem:[%s234] sm:$0xff]
        %v239 = vld [vmem:[%s196] sm:$0xff]
        %v240 = vld [vmem:[%s196 + $0x8] sm:$0xff]
        %v241 = vld [vmem:[%s196 + $0x10] sm:$0xff]
        %v242 = vld [vmem:[%s196 + $0x18] sm:$0xff]
        %v243 = vmul.f32 %v238, %v238
        %v244 = vrcp.pop %v243
        %v245 = vmul.f32 0.5, %v244
        %v246 = vlog2.pop %v238
        %v247 = vmul.f32 %v246, 0.6931472
        %v248 = vsub.f32 0.0, %v247
        %v249 = vsub.f32 %v248, 0.9189385
        %v254 = vlaneseq
        %v255 = vshrl.u32 %v254, 7
        %v256 = vsub.s32 0, %v255
        %v257 = vrot.slane %v239, %v256
        %v258 = vlaneseq
        %v259 = vshrl.u32 %v258, 7
        %v260 = vsub.s32 1, %v259
        %v261 = vrot.slane %v239, %v260
        %v262 = vlaneseq
        %v263 = vshrl.u32 %v262, 7
        %v264 = vsub.s32 2, %v263
        %v265 = vrot.slane %v239, %v264
        %v266 = vlaneseq
        %v267 = vshrl.u32 %v266, 7
        %v268 = vsub.s32 3, %v267
        %v269 = vrot.slane %v239, %v268
        %v270 = vlaneseq
        %v271 = vshrl.u32 %v270, 7
        %v272 = vsub.s32 4, %v271
        %v273 = vrot.slane %v239, %v272
        %v274 = vlaneseq
        %v275 = vshrl.u32 %v274, 7
        %v276 = vsub.s32 5, %v275
        %v277 = vrot.slane %v239, %v276
        %v278 = vlaneseq
        %v279 = vshrl.u32 %v278, 7
        %v280 = vsub.s32 6, %v279
        %v281 = vrot.slane %v239, %v280
        %v282 = vlaneseq
        %v283 = vshrl.u32 %v282, 7
        %v284 = vsub.s32 7, %v283
        %v285 = vrot.slane %v239, %v284
        %v286 = vlaneseq
        %v287 = vshrl.u32 %v286, 7
        %v288 = vsub.s32 0, %v287
        %v289 = vrot.slane %v240, %v288
        %v290 = vlaneseq
        %v291 = vshrl.u32 %v290, 7
        %v292 = vsub.s32 1, %v291
        %v293 = vrot.slane %v240, %v292
        %v294 = vlaneseq
        %v295 = vshrl.u32 %v294, 7
        %v296 = vsub.s32 2, %v295
        %v297 = vrot.slane %v240, %v296
        %v298 = vlaneseq
        %v299 = vshrl.u32 %v298, 7
        %v300 = vsub.s32 3, %v299
        %v301 = vrot.slane %v240, %v300
        %v302 = vlaneseq
        %v303 = vshrl.u32 %v302, 7
        %v304 = vsub.s32 4, %v303
        %v305 = vrot.slane %v240, %v304
        %v306 = vlaneseq
        %v307 = vshrl.u32 %v306, 7
        %v308 = vsub.s32 5, %v307
        %v309 = vrot.slane %v240, %v308
        %v310 = vlaneseq
        %v311 = vshrl.u32 %v310, 7
        %v312 = vsub.s32 6, %v311
        %v313 = vrot.slane %v240, %v312
        %v314 = vlaneseq
        %v315 = vshrl.u32 %v314, 7
        %v316 = vsub.s32 7, %v315
        %v317 = vrot.slane %v240, %v316
        %v318 = vlaneseq
        %v319 = vshrl.u32 %v318, 7
        %v320 = vsub.s32 0, %v319
        %v321 = vrot.slane %v241, %v320
        %v322 = vlaneseq
        %v323 = vshrl.u32 %v322, 7
        %v324 = vsub.s32 1, %v323
        %v325 = vrot.slane %v241, %v324
        %v326 = vlaneseq
        %v327 = vshrl.u32 %v326, 7
        %v328 = vsub.s32 2, %v327
        %v329 = vrot.slane %v241, %v328
        %v330 = vlaneseq
        %v331 = vshrl.u32 %v330, 7
        %v332 = vsub.s32 3, %v331
        %v333 = vrot.slane %v241, %v332
        %v334 = vlaneseq
        %v335 = vshrl.u32 %v334, 7
        %v336 = vsub.s32 4, %v335
        %v337 = vrot.slane %v241, %v336
        %v338 = vlaneseq
        %v339 = vshrl.u32 %v338, 7
        %v340 = vsub.s32 5, %v339
        %v341 = vrot.slane %v241, %v340
        %v342 = vlaneseq
        %v343 = vshrl.u32 %v342, 7
        %v344 = vsub.s32 6, %v343
        %v345 = vrot.slane %v241, %v344
        %v346 = vlaneseq
        %v347 = vshrl.u32 %v346, 7
        %v348 = vsub.s32 7, %v347
        %v349 = vrot.slane %v241, %v348
        %v350 = vlaneseq
        %v351 = vshrl.u32 %v350, 7
        %v352 = vsub.s32 0, %v351
        %v353 = vrot.slane %v242, %v352
        %v354 = vlaneseq
        %v355 = vshrl.u32 %v354, 7
        %v356 = vsub.s32 1, %v355
        %v357 = vrot.slane %v242, %v356
        %v358 = vlaneseq
        %v359 = vshrl.u32 %v358, 7
        %v360 = vsub.s32 2, %v359
        %v361 = vrot.slane %v242, %v360
        %v362 = vlaneseq
        %v363 = vshrl.u32 %v362, 7
        %v364 = vsub.s32 3, %v363
        %v365 = vrot.slane %v242, %v364
        %v366 = vlaneseq
        %v367 = vshrl.u32 %v366, 7
        %v368 = vsub.s32 4, %v367
        %v369 = vrot.slane %v242, %v368
        %v370 = vlaneseq
        %v371 = vshrl.u32 %v370, 7
        %v372 = vsub.s32 5, %v371
        %v373 = vrot.slane %v242, %v372
        %v374 = vlaneseq
        %v375 = vshrl.u32 %v374, 7
        %v376 = vsub.s32 6, %v375
        %v377 = vrot.slane %v242, %v376
        %v378 = vlaneseq
        %v379 = vshrl.u32 %v378, 7
        %v380 = vsub.s32 7, %v379
        %v381 = vrot.slane %v242, %v380
        %415 = vset.pattern.permute.xlu0 0
        %416 = vperm.xlu0 %415, %v237
        %v417 = vpop.permute.xlu0 %416
        %v419 = vsub.f32 %v257, %v417
        %v420 = vsub.f32 %v261, %v417
        %v421 = vsub.f32 %v265, %v417
        %v422 = vsub.f32 %v269, %v417
        %v423 = vsub.f32 %v273, %v417
        %v424 = vsub.f32 %v277, %v417
        %v425 = vsub.f32 %v281, %v417
        %v426 = vsub.f32 %v285, %v417
        %v427 = vsub.f32 %v289, %v417
        %v428 = vsub.f32 %v293, %v417
        %v429 = vsub.f32 %v297, %v417
        %v430 = vsub.f32 %v301, %v417
        %v431 = vsub.f32 %v305, %v417
        %v432 = vsub.f32 %v309, %v417
        %v433 = vsub.f32 %v313, %v417
        %v434 = vsub.f32 %v317, %v417
        %v435 = vsub.f32 %v321, %v417
        %v436 = vsub.f32 %v325, %v417
        %v437 = vsub.f32 %v329, %v417
        %v438 = vsub.f32 %v333, %v417
        %v439 = vsub.f32 %v337, %v417
        %v440 = vsub.f32 %v341, %v417
        %v441 = vsub.f32 %v345, %v417
        %v442 = vsub.f32 %v349, %v417
        %v443 = vsub.f32 %v353, %v417
        %v444 = vsub.f32 %v357, %v417
        %v445 = vsub.f32 %v361, %v417
        %v446 = vsub.f32 %v365, %v417
        %v447 = vsub.f32 %v369, %v417
        %v448 = vsub.f32 %v373, %v417
        %v449 = vsub.f32 %v377, %v417
        %v450 = vsub.f32 %v381, %v417
        %v451 = vmul.f32 %v419, %v419
        %v452 = vmul.f32 %v420, %v420
        %v453 = vmul.f32 %v421, %v421
        %v454 = vmul.f32 %v422, %v422
        %v455 = vmul.f32 %v423, %v423
        %v456 = vmul.f32 %v424, %v424
        %v457 = vmul.f32 %v425, %v425
        %v458 = vmul.f32 %v426, %v426
        %v459 = vmul.f32 %v427, %v427
        %v460 = vmul.f32 %v428, %v428
        %v461 = vmul.f32 %v429, %v429
        %v462 = vmul.f32 %v430, %v430
        %v463 = vmul.f32 %v431, %v431
        %v464 = vmul.f32 %v432, %v432
        %v465 = vmul.f32 %v433, %v433
        %v466 = vmul.f32 %v434, %v434
        %v467 = vmul.f32 %v435, %v435
        %v468 = vmul.f32 %v436, %v436
        %v469 = vmul.f32 %v437, %v437
        %v470 = vmul.f32 %v438, %v438
        %v471 = vmul.f32 %v439, %v439
        %v472 = vmul.f32 %v440, %v440
        %v473 = vmul.f32 %v441, %v441
        %v474 = vmul.f32 %v442, %v442
        %v475 = vmul.f32 %v443, %v443
        %v476 = vmul.f32 %v444, %v444
        %v477 = vmul.f32 %v445, %v445
        %v478 = vmul.f32 %v446, %v446
        %v479 = vmul.f32 %v447, %v447
        %v480 = vmul.f32 %v448, %v448
        %v481 = vmul.f32 %v449, %v449
        %v482 = vmul.f32 %v450, %v450
        %484 = vset.pattern.permute.xlu0 0
        %485 = vperm.xlu0 %484, %v245
        %v486 = vpop.permute.xlu0 %485
        %v488 = vmul.f32 %v486, %v451
        %v489 = vmul.f32 %v486, %v452
        %v490 = vmul.f32 %v486, %v453
        %v491 = vmul.f32 %v486, %v454
        %v492 = vmul.f32 %v486, %v455
        %v493 = vmul.f32 %v486, %v456
        %v494 = vmul.f32 %v486, %v457
        %v495 = vmul.f32 %v486, %v458
        %v496 = vmul.f32 %v486, %v459
        %v497 = vmul.f32 %v486, %v460
        %v498 = vmul.f32 %v486, %v461
        %v499 = vmul.f32 %v486, %v462
        %v500 = vmul.f32 %v486, %v463
        %v501 = vmul.f32 %v486, %v464
        %v502 = vmul.f32 %v486, %v465
        %v503 = vmul.f32 %v486, %v466
        %v504 = vmul.f32 %v486, %v467
        %v505 = vmul.f32 %v486, %v468
        %v506 = vmul.f32 %v486, %v469
        %v507 = vmul.f32 %v486, %v470
        %v508 = vmul.f32 %v486, %v471
        %v509 = vmul.f32 %v486, %v472
        %v510 = vmul.f32 %v486, %v473
        %v511 = vmul.f32 %v486, %v474
        %v512 = vmul.f32 %v486, %v475
        %v513 = vmul.f32 %v486, %v476
        %v514 = vmul.f32 %v486, %v477
        %v515 = vmul.f32 %v486, %v478
        %v516 = vmul.f32 %v486, %v479
        %v517 = vmul.f32 %v486, %v480
        %v518 = vmul.f32 %v486, %v481
        %v519 = vmul.f32 %v486, %v482
        %521 = vset.pattern.permute.xlu0 0
        %522 = vperm.xlu0 %521, %v249
        %v523 = vpop.permute.xlu0 %522
        %v525 = vsub.f32 %v523, %v488
        %v526 = vsub.f32 %v523, %v489
        %v527 = vsub.f32 %v523, %v490
        %v528 = vsub.f32 %v523, %v491
        %v529 = vsub.f32 %v523, %v492
        %v530 = vsub.f32 %v523, %v493
        %v531 = vsub.f32 %v523, %v494
        %v532 = vsub.f32 %v523, %v495
        %v533 = vsub.f32 %v523, %v496
        %v534 = vsub.f32 %v523, %v497
        %v535 = vsub.f32 %v523, %v498
        %v536 = vsub.f32 %v523, %v499
        %v537 = vsub.f32 %v523, %v500
        %v538 = vsub.f32 %v523, %v501
        %v539 = vsub.f32 %v523, %v502
        %v540 = vsub.f32 %v523, %v503
        %v541 = vsub.f32 %v523, %v504
        %v542 = vsub.f32 %v523, %v505
        %v543 = vsub.f32 %v523, %v506
        %v544 = vsub.f32 %v523, %v507
        %v545 = vsub.f32 %v523, %v508
        %v546 = vsub.f32 %v523, %v509
        %v547 = vsub.f32 %v523, %v510
        %v548 = vsub.f32 %v523, %v511
        %v549 = vsub.f32 %v523, %v512
        %v550 = vsub.f32 %v523, %v513
        %v551 = vsub.f32 %v523, %v514
        %v552 = vsub.f32 %v523, %v515
        %v553 = vsub.f32 %v523, %v516
        %v554 = vsub.f32 %v523, %v517
        %v555 = vsub.f32 %v523, %v518
        %v556 = vsub.f32 %v523, %v519
        %v557 = vmul.f32 %v525, 1.442695
        %v558 = vpow.pop %v557
        %v559 = vmul.f32 %v526, 1.442695
        %v560 = vpow.pop %v559
        %v561 = vmul.f32 %v527, 1.442695
        %v562 = vpow.pop %v561
        %v563 = vmul.f32 %v528, 1.442695
        %v564 = vpow.pop %v563
        %v565 = vmul.f32 %v529, 1.442695
        %v566 = vpow.pop %v565
        %v567 = vmul.f32 %v530, 1.442695
        %v568 = vpow.pop %v567
        %v569 = vmul.f32 %v531, 1.442695
        %v570 = vpow.pop %v569
        %v571 = vmul.f32 %v532, 1.442695
        %v572 = vpow.pop %v571
        %v573 = vmul.f32 %v533, 1.442695
        %v574 = vpow.pop %v573
        %v575 = vmul.f32 %v534, 1.442695
        %v576 = vpow.pop %v575
        %v577 = vmul.f32 %v535, 1.442695
        %v578 = vpow.pop %v577
        %v579 = vmul.f32 %v536, 1.442695
        %v580 = vpow.pop %v579
        %v581 = vmul.f32 %v537, 1.442695
        %v582 = vpow.pop %v581
        %v583 = vmul.f32 %v538, 1.442695
        %v584 = vpow.pop %v583
        %v585 = vmul.f32 %v539, 1.442695
        %v586 = vpow.pop %v585
        %v587 = vmul.f32 %v540, 1.442695
        %v588 = vpow.pop %v587
        %v589 = vmul.f32 %v541, 1.442695
        %v590 = vpow.pop %v589
        %v591 = vmul.f32 %v542, 1.442695
        %v592 = vpow.pop %v591
        %v593 = vmul.f32 %v543, 1.442695
        %v594 = vpow.pop %v593
        %v595 = vmul.f32 %v544, 1.442695
        %v596 = vpow.pop %v595
        %v597 = vmul.f32 %v545, 1.442695
        %v598 = vpow.pop %v597
        %v599 = vmul.f32 %v546, 1.442695
        %v600 = vpow.pop %v599
        %v601 = vmul.f32 %v547, 1.442695
        %v602 = vpow.pop %v601
        %v603 = vmul.f32 %v548, 1.442695
        %v604 = vpow.pop %v603
        %v605 = vmul.f32 %v549, 1.442695
        %v606 = vpow.pop %v605
        %v607 = vmul.f32 %v550, 1.442695
        %v608 = vpow.pop %v607
        %v609 = vmul.f32 %v551, 1.442695
        %v610 = vpow.pop %v609
        %v611 = vmul.f32 %v552, 1.442695
        %v612 = vpow.pop %v611
        %v613 = vmul.f32 %v553, 1.442695
        %v614 = vpow.pop %v613
        %v615 = vmul.f32 %v554, 1.442695
        %v616 = vpow.pop %v615
        %v617 = vmul.f32 %v555, 1.442695
        %v618 = vpow.pop %v617
        %v619 = vmul.f32 %v556, 1.442695
        %v620 = vpow.pop %v619
        %621 = vst [vmem:[%s226] sm:$0xff] %v558
        %622 = vst [vmem:[%s226 + $0x8] sm:$0xff] %v560
        %623 = vst [vmem:[%s226 + $0x10] sm:$0xff] %v562
        %624 = vst [vmem:[%s226 + $0x18] sm:$0xff] %v564
        %625 = vst [vmem:[%s226 + $0x20] sm:$0xff] %v566
        %626 = vst [vmem:[%s226 + $0x28] sm:$0xff] %v568
        %627 = vst [vmem:[%s226 + $0x30] sm:$0xff] %v570
        %628 = vst [vmem:[%s226 + $0x38] sm:$0xff] %v572
        %629 = vst [vmem:[%s226 + $0x40] sm:$0xff] %v574
        %630 = vst [vmem:[%s226 + $0x48] sm:$0xff] %v576
        %631 = vst [vmem:[%s226 + $0x50] sm:$0xff] %v578
        %632 = vst [vmem:[%s226 + $0x58] sm:$0xff] %v580
        %633 = vst [vmem:[%s226 + $0x60] sm:$0xff] %v582
        %634 = vst [vmem:[%s226 + $0x68] sm:$0xff] %v584
        %635 = vst [vmem:[%s226 + $0x70] sm:$0xff] %v586
        %636 = vst [vmem:[%s226 + $0x78] sm:$0xff] %v588
        %637 = vst [vmem:[%s226 + $0x80] sm:$0xff] %v590
        %638 = vst [vmem:[%s226 + $0x88] sm:$0xff] %v592
        %639 = vst [vmem:[%s226 + $0x90] sm:$0xff] %v594
        %640 = vst [vmem:[%s226 + $0x98] sm:$0xff] %v596
        %641 = vst [vmem:[%s226 + $0xa0] sm:$0xff] %v598
        %642 = vst [vmem:[%s226 + $0xa8] sm:$0xff] %v600
        %643 = vst [vmem:[%s226 + $0xb0] sm:$0xff] %v602
        %644 = vst [vmem:[%s226 + $0xb8] sm:$0xff] %v604
        %645 = vst [vmem:[%s226 + $0xc0] sm:$0xff] %v606
        %646 = vst [vmem:[%s226 + $0xc8] sm:$0xff] %v608
        %647 = vst [vmem:[%s226 + $0xd0] sm:$0xff] %v610
        %648 = vst [vmem:[%s226 + $0xd8] sm:$0xff] %v612
        %649 = vst [vmem:[%s226 + $0xe0] sm:$0xff] %v614
        %650 = vst [vmem:[%s226 + $0xe8] sm:$0xff] %v616
        %651 = vst [vmem:[%s226 + $0xf0] sm:$0xff] %v618
        %652 = vst [vmem:[%s226 + $0xf8] sm:$0xff] %v620
        %s653 = sand.u32 %s120, 1
        %s654 = scalar_lea.sflag [#allocation4], %s653
        %s655 = sand.u32 %s120, 1
        %s656 = smul.addr %s655, 256
        %s657 = scalar_lea.vmem [#allocation5], %s656
        // Predicated region
        $region37: #{normal_prob.1} parent=31 // pred_check
          %p658 = pneg %p130
        $region38: #{normal_prob.1} parent=31 // pred_check_branch
          %660 = sbr.rel (%p658) target = $region40
        $region39: #{normal_prob.1} parent=31 // pred_region
          %s661 = smul.u32 32, %s25
          %s663 = ssub.s32 4096, 4096
          %664 = vsyncadd %s654, %s663
          %s665 = smul.addr %s24, 64
          %s666 = sadd.s32 %s661, %s665
          %s667 = smul.addr %s666, 128
          %s668 = scalar_lea.hbm %s3, %s667
          %s670 = sshll.u32 %s657, 4
          %s671 = int_to_ptr.vmem [resolvable:$true] %s670
          %673 = dma.vmem_to_hbm [thread:$0]  %s671, 4096, %s668, %s654
        $region40: #{normal_prob.1} parent=31 // pred_fallthru
          _
      $region32: #{normal_prob.1} parent=5 // pred_fallthru
        _
      %p674 = scmp.le.s32.totalorder 2, %s15
      // Predicated region
      $region41: #{normal_prob.1} parent=5 // pred_check
        %p675 = pneg %p674
      $region42: #{normal_prob.1} parent=5 // pred_check_branch
        %677 = sbr.rel (%p675) target = $region44
      $region43: #{normal_prob.1} parent=5 // pred_region
        %s678 = ssub.s32 %s15, 2
        // Predicated region
        $region45: #{normal_prob.1} parent=43 // pred_check
          %p679 = pneg %p136
        $region46: #{normal_prob.1} parent=43 // pred_check_branch
          %681 = sbr.rel (%p679) target = $region48
        $region47: #{normal_prob.1} parent=43 // pred_region
          %s682 = sand.u32 %s121, 1
          %s683 = scalar_lea.sflag [#allocation4], %s682
          %s684 = sand.u32 %s121, 1
          %s685 = smul.addr %s684, 256
          %s686 = scalar_lea.vmem [#allocation5], %s685
          %687 = dma.done %s683, 4096
        $region48: #{normal_prob.1} parent=43 // pred_fallthru
          _
      $region44: #{normal_prob.1} parent=5 // pred_fallthru
        _
    $region6: #{normal_prob.1} parent=1 // loop_footer
      %s19 = sadd.s32 1, %s15
    $region7: #{normal_prob.1} parent=1 // loop_footer_branch
      %14 = sbr.rel target = $region3
    $region8: #{normal_prob.1} parent=1 // loop_exit
      _
    %688 = vsyncpa [#allocation3], 1
    %s689 = scalar_lea.sflag [#allocation3], 1
    %690 = vsyncpa %s689, 1
    %691 = vsyncpa [#allocation4], 1
    %s692 = scalar_lea.sflag [#allocation4], 1
    %693 = vsyncpa %s692, 1

</llo_original>
